<compile_context>
chip_gen: v5e
topology: v5e:2x2
jax: 0.10.0
libtpu: 0.0.40
codegen_flags: <defaults>
</compile_context>

<pallas_src>
import functools
import math

import jax
import jax.numpy as jnp
import numpy as np
from jax.experimental import pallas as pl
from jax.experimental.pallas import tpu as pltpu

HIDDEN = 128   # NoisyLinear hidden width in Network
_MIN_TB = 8    # sublane granularity for the batch tile


def _round_up(x, m):
    return ((x + m - 1) // m) * m


def network_kernel(x_ref, w1_ref, w23_ref, b_ref, out_ref, *, hidden):
    """relu(x@W1+b1) -> relu(.@W2+b2) -> .@W3+b3 on one batch tile.

    x_ref   : [TB, in_dim]            input dtype (streamed)
    w1_ref  : [in_dim, hidden]        compute dtype (resident)
    w23_ref : [hidden, hidden+OUTP]   compute dtype, W2 | W3(padded) packed (resident)
    b_ref   : [1, 2*hidden + OUTP]    f32 bias slab (resident)
    out_ref : [TB, OUTP]              out dtype (streamed, 128-lane dense)
    """
    cdt = w1_ref.dtype
    x = x_ref[...]

    b1 = b_ref[:, 0:hidden]
    b2 = b_ref[:, hidden:2 * hidden]
    b3 = b_ref[:, 2 * hidden:]

    # feature: Linear(in_dim, 128) + ReLU
    h = jnp.dot(x.astype(cdt), w1_ref[...],
                preferred_element_type=jnp.float32) + b1
    h = jnp.maximum(h, 0.0)

    # noisy_layer1: Linear(128, 128) + ReLU
    h = jnp.dot(h.astype(cdt), w23_ref[:, 0:hidden],
                preferred_element_type=jnp.float32) + b2
    h = jnp.maximum(h, 0.0)

    # noisy_layer2: Linear(128, out_dim) (columns padded to a full lane width)
    out = jnp.dot(h.astype(cdt), w23_ref[:, hidden:],
                  preferred_element_type=jnp.float32) + b3
    out_ref[...] = out.astype(out_ref.dtype)


def network_forward(x, eff, *, out_dim, tile_b=2048,
                    compute_dtype=jnp.bfloat16, out_dtype=None):
    """Pallas forward of Network.

    `eff` holds the *effective* NoisyLinear weights/biases in PyTorch layout:
      W1 [128, in_dim], b1 [128], W2 [128, 128], b2 [128],
      W3 [out_dim, 128], b3 [out_dim]   (W = mu_w + sigma_w*eps_w, etc.)

    The kernel output dtype defaults to `compute_dtype` (bf16) to halve the
    writeback stream; pass out_dtype=jnp.float32 for exact-f32 emission.
    """
    if out_dtype is None:
        out_dtype = compute_dtype
    x = jnp.asarray(x)                 # no standalone f32 cast; kernel casts to compute dtype
    B, in_dim = x.shape
    H = HIDDEN
    out_pad = _round_up(out_dim, 128)

    # ---- pack parameters: [in, out] layout for x @ W, compute dtype at MXU ----
    w1 = eff["W1"].T.astype(compute_dtype)                               # [in, H]
    w2 = eff["W2"].T                                                     # [H, H]
    w3 = jnp.zeros((H, out_pad), jnp.float32).at[:, :out_dim].set(
        eff["W3"].T)                                                     # [H, out_pad]
    w23 = jnp.concatenate([w2, w3], axis=1).astype(compute_dtype)        # [H, H+out_pad]

    b3p = jnp.zeros((out_pad,), jnp.float32).at[:out_dim].set(eff["b3"])
    bias = jnp.concatenate([eff["b1"], eff["b2"], b3p])[None, :].astype(jnp.float32)

    # ---- batch tiling -------------------------------------------------------
    #  * n_steps big enough that each tile is <= tile_b rows,
    #  * >= 2 steps when there is enough work (both TCs busy on v7x),
    #  * tile = ceil(B / n_steps) rounded to 8 -> padding bounded by one
    #    sublane group instead of a whole tile.
    n_steps = max(1, pl.cdiv(B, tile_b))
    if B >= 2 * _MIN_TB:
        n_steps = max(n_steps, 2)
    tb = _round_up(pl.cdiv(B, n_steps), _MIN_TB)
    b_pad = n_steps * tb
    if b_pad != B:
        x = jnp.pad(x, ((0, b_pad - B), (0, 0)))   # NOTE: extra HBM copy only when padding is needed
    grid = (n_steps,)

    kernel = functools.partial(network_kernel, hidden=H)

    cost = pl.CostEstimate(
        flops=2 * b_pad * (in_dim * H + H * H + H * out_pad),
        transcendentals=0,
        bytes_accessed=int(x.size * x.dtype.itemsize
                           + w1.size * w1.dtype.itemsize
                           + w23.size * w23.dtype.itemsize
                           + bias.size * bias.dtype.itemsize
                           + b_pad * out_pad * jnp.dtype(out_dtype).itemsize),
    )

    out = pl.pallas_call(
        kernel,
        out_shape=jax.ShapeDtypeStruct((b_pad, out_pad), out_dtype),
        grid_spec=pltpu.PrefetchScalarGridSpec(
            num_scalar_prefetch=0,
            grid=grid,
            in_specs=[
                pl.BlockSpec((tb, in_dim), lambda i: (i, 0)),          # x: streamed
                pl.BlockSpec((in_dim, H), lambda i: (0, 0)),           # W1: resident
                pl.BlockSpec((H, H + out_pad), lambda i: (0, 0)),      # W2|W3: resident
                pl.BlockSpec((1, 2 * H + out_pad), lambda i: (0, 0)),  # biases: resident
            ],
            out_specs=pl.BlockSpec((tb, out_pad), lambda i: (i, 0)),
        ),
        compiler_params=pltpu.CompilerParams(
            dimension_semantics=("parallel",),  # batch axis -> both TCs on v7x
        ),
        cost_estimate=cost,
    )(x, w1, w23, bias)

    return out[:B, :out_dim]


# ------------------------- parameter construction ---------------------------

def init_noisy_linear(key, in_dim, out_dim, sigma_init=0.4):
    """Mirror NoisyLinear.__init__ / init_params / reset_noise from the spec."""
    k_mu_w, k_mu_b, k_eps_in, k_eps_out = jax.random.split(key, 4)
    bound = math.sqrt(1.0 / in_dim)
    mu_w = jax.random.uniform(k_mu_w, (out_dim, in_dim), jnp.float32, -bound, bound)
    mu_b = jax.random.uniform(k_mu_b, (out_dim,), jnp.float32, -bound, bound)
    sigma_w = jnp.full((out_dim, in_dim), sigma_init / math.sqrt(out_dim), jnp.float32)
    sigma_b = jnp.full((out_dim,), sigma_init / math.sqrt(out_dim), jnp.float32)

    def factorize_noise(k, size):
        # matches the source: normals with scale=0.001, then sgn(x)*sqrt(|x|)
        n = 0.001 * jax.random.normal(k, (size,), jnp.float32)
        return jnp.sign(n) * jnp.sqrt(jnp.abs(n))

    eps_out = factorize_noise(k_eps_out, out_dim)
    eps_in = factorize_noise(k_eps_in, in_dim)
    return dict(mu_w=mu_w, mu_b=mu_b, sigma_w=sigma_w, sigma_b=sigma_b,
                eps_w=jnp.outer(eps_out, eps_in), eps_b=eps_out)


def effective_linear(p):
    """NoisyLinear.forward's effective weight/bias: mu + sigma * eps."""
    return p["mu_w"] + p["sigma_w"] * p["eps_w"], p["mu_b"] + p["sigma_b"] * p["eps_b"]


# ------------------------------ references ----------------------------------

def torch_style_reference(x, eff):
    """Pure-JAX f32 mirror of Network.forward (PyTorch weight layout)."""
    x = jnp.asarray(x, jnp.float32)
    h = jnp.maximum(x @ eff["W1"].T + eff["b1"], 0.0)
    h = jnp.maximum(h @ eff["W2"].T + eff["b2"], 0.0)
    return h @ eff["W3"].T + eff["b3"]


def bf16_reference(x, eff):
    """Same math with the kernel's bf16-operand / f32-accumulate casts."""
    cdt = jnp.bfloat16
    h = jnp.dot(x.astype(cdt), eff["W1"].T.astype(cdt),
                preferred_element_type=jnp.float32) + eff["b1"]
    h = jnp.maximum(h, 0.0)
    h = jnp.dot(h.astype(cdt), eff["W2"].T.astype(cdt),
                preferred_element_type=jnp.float32) + eff["b2"]
    h = jnp.maximum(h, 0.0)
    return jnp.dot(h.astype(cdt), eff["W3"].T.astype(cdt),
                   preferred_element_type=jnp.float32) + eff["b3"]


if __name__ == "__main__":
    # Small shapes consistent with the module: Network(in_dim=[32], out_dim=16)
    batch = 8
    in_dim = [32]
    out_dim = 16

    key = jax.random.PRNGKey(0)
    k_feat, k_l1, k_l2, k_x, k_x2 = jax.random.split(key, 5)

    feature = init_noisy_linear(k_feat, in_dim[0], HIDDEN)
    layer1 = init_noisy_linear(k_l1, HIDDEN, HIDDEN)
    layer2 = init_noisy_linear(k_l2, HIDDEN, out_dim)

    W1, b1 = effective_linear(feature)
    W2, b2 = effective_linear(layer1)
    W3, b3 = effective_linear(layer2)
    eff = dict(W1=W1, b1=b1, W2=W2, b2=b2, W3=W3, b3=b3)

    x = jax.random.normal(k_x, (batch, in_dim[0]), jnp.float32)

    # 1) f32 compute / f32 output path: must match the PyTorch-style reference tightly.
    out_f32 = jax.block_until_ready(
        network_forward(x, eff, out_dim=out_dim, compute_dtype=jnp.float32))
    ref_f32 = torch_style_reference(x, eff)
    np.testing.assert_allclose(np.asarray(out_f32), np.asarray(ref_f32),
                               rtol=1e-5, atol=1e-5)

    # 2) bf16-at-the-MXU / bf16 output path (default perf config): match a
    #    reference with the same operand casts, and stay close to f32 math.
    out_bf16 = jax.block_until_ready(
        network_forward(x, eff, out_dim=out_dim, compute_dtype=jnp.bfloat16))
    ref_bf16 = bf16_reference(x, eff)
    np.testing.assert_allclose(np.asarray(out_bf16.astype(jnp.float32)),
                               np.asarray(ref_bf16), rtol=2e-2, atol=2e-2)
    np.testing.assert_allclose(np.asarray(out_bf16.astype(jnp.float32)),
                               np.asarray(ref_f32), rtol=1e-1, atol=1e-1)

    # 3) awkward batch size: exercises the >=2-step grid and bounded padding.
    x_big = jax.random.normal(k_x2, (300, in_dim[0]), jnp.float32)
    out_big = jax.block_until_ready(
        network_forward(x_big, eff, out_dim=out_dim, compute_dtype=jnp.float32))
    ref_big = torch_style_reference(x_big, eff)
    np.testing.assert_allclose(np.asarray(out_big), np.asarray(ref_big),
                               rtol=1e-5, atol=1e-5)

    # TODO(synk): reset_noise() is host-side RNG-buffer mutation; noise eps is
    # sampled in the wrapper and folded into effective weights (same forward
    # semantics). The unused `dueling` flag of Network.forward is ignored.
    print("KERNEL_OK")
</pallas_src>

<mosaic_0001>
module attributes {stable_mosaic.version = 11 : i64} {
  func.func @network_kernel(%arg0: i32, %arg1: memref<8x32xf32, #tpu.memory_space<vmem>>, %arg2: memref<32x128xf32, #tpu.memory_space<vmem>>, %arg3: memref<128x256xf32, #tpu.memory_space<vmem>>, %arg4: memref<1x384xf32, #tpu.memory_space<vmem>>, %arg5: memref<8x128xf32, #tpu.memory_space<vmem>>) attributes {dimension_semantics = [#tpu.dimension_semantics<parallel>], iteration_bounds = array<i64: 1>, scalar_prefetch = 0 : i64, scratch_operands = 0 : i64, tpu.core_type = #tpu.core_type<tc>, window_params = [{transform_indices = @transform_0, window_bounds = array<i64: 8, 32>}, {pipeline_mode = #tpu.pipeline_mode<synchronous>, transform_indices = @transform_1, window_bounds = array<i64: 32, 128>}, {pipeline_mode = #tpu.pipeline_mode<synchronous>, transform_indices = @transform_2, window_bounds = array<i64: 128, 256>}, {pipeline_mode = #tpu.pipeline_mode<synchronous>, transform_indices = @transform_3, window_bounds = array<i64: 1, 384>}, {transform_indices = @transform_4, window_bounds = array<i64: 8, 128>}]} {
    %c0 = arith.constant 0 : index
    %c0_0 = arith.constant 0 : index
    %0 = vector.load %arg1[%c0, %c0_0] : memref<8x32xf32, #tpu.memory_space<vmem>>, vector<8x32xf32>
    %c0_1 = arith.constant 0 : index
    %c0_2 = arith.constant 0 : index
    %1 = vector.load %arg4[%c0_1, %c0_2] : memref<1x384xf32, #tpu.memory_space<vmem>>, vector<1x128xf32>
    %c0_3 = arith.constant 0 : index
    %c128 = arith.constant 128 : index
    %2 = vector.load %arg4[%c0_3, %c128] : memref<1x384xf32, #tpu.memory_space<vmem>>, vector<1x128xf32>
    %c0_4 = arith.constant 0 : index
    %c256 = arith.constant 256 : index
    %3 = vector.load %arg4[%c0_4, %c256] : memref<1x384xf32, #tpu.memory_space<vmem>>, vector<1x128xf32>
    %c0_5 = arith.constant 0 : index
    %c0_6 = arith.constant 0 : index
    %4 = vector.load %arg2[%c0_5, %c0_6] : memref<32x128xf32, #tpu.memory_space<vmem>>, vector<32x128xf32>
    %cst = arith.constant dense<0.000000e+00> : vector<8x128xf32>
    %5 = tpu.matmul %0, %4, %cst {dimension_numbers = #tpu.dot_dimension_numbers<[1], [0], [0], [1], [0, 0, 1, 1], [], []>} : vector<8x32xf32>, vector<32x128xf32>, vector<8x128xf32> -> vector<8x128xf32>
    %6 = vector.broadcast %1 : vector<1x128xf32> to vector<8x128xf32>
    %7 = arith.addf %5, %6 : vector<8x128xf32>
    %cst_7 = arith.constant 0.000000e+00 : f32
    %8 = vector.broadcast %cst_7 : f32 to vector<8x128xf32>
    %9 = arith.maximumf %7, %8 : vector<8x128xf32>
    %c0_8 = arith.constant 0 : index
    %c0_9 = arith.constant 0 : index
    %10 = vector.load %arg3[%c0_8, %c0_9] : memref<128x256xf32, #tpu.memory_space<vmem>>, vector<128x128xf32>
    %cst_10 = arith.constant dense<0.000000e+00> : vector<8x128xf32>
    %11 = tpu.matmul %9, %10, %cst_10 {dimension_numbers = #tpu.dot_dimension_numbers<[1], [0], [0], [1], [0, 0, 1, 1], [], []>} : vector<8x128xf32>, vector<128x128xf32>, vector<8x128xf32> -> vector<8x128xf32>
    %12 = vector.broadcast %2 : vector<1x128xf32> to vector<8x128xf32>
    %13 = arith.addf %11, %12 : vector<8x128xf32>
    %cst_11 = arith.constant 0.000000e+00 : f32
    %14 = vector.broadcast %cst_11 : f32 to vector<8x128xf32>
    %15 = arith.maximumf %13, %14 : vector<8x128xf32>
    %c0_12 = arith.constant 0 : index
    %c128_13 = arith.constant 128 : index
    %16 = vector.load %arg3[%c0_12, %c128_13] : memref<128x256xf32, #tpu.memory_space<vmem>>, vector<128x128xf32>
    %cst_14 = arith.constant dense<0.000000e+00> : vector<8x128xf32>
    %17 = tpu.matmul %15, %16, %cst_14 {dimension_numbers = #tpu.dot_dimension_numbers<[1], [0], [0], [1], [0, 0, 1, 1], [], []>} : vector<8x128xf32>, vector<128x128xf32>, vector<8x128xf32> -> vector<8x128xf32>
    %18 = vector.broadcast %3 : vector<1x128xf32> to vector<8x128xf32>
    %19 = arith.addf %17, %18 : vector<8x128xf32>
    %c0_15 = arith.constant 0 : index
    %c0_16 = arith.constant 0 : index
    %20 = vector.load %arg5[%c0_15, %c0_16] : memref<8x128xf32, #tpu.memory_space<vmem>>, vector<8x128xf32>
    tpu.vector_store %arg5[%c0_15, %c0_16], %19 {strides = array<i32>} : memref<8x128xf32, #tpu.memory_space<vmem>>, vector<8x128xf32>,
    return
  }
  func.func @transform_0(%arg0: i32) -> (i32, i32) {
    %c0_i32 = arith.constant 0 : i32
    %c0_i32_0 = arith.constant 0 : i32
    return %arg0, %c0_i32 : i32, i32
  }
  func.func @transform_1(%arg0: i32) -> (i32, i32) {
    %c0_i32 = arith.constant 0 : i32
    %c0_i32_0 = arith.constant 0 : i32
    %c0_i32_1 = arith.constant 0 : i32
    return %c0_i32, %c0_i32_0 : i32, i32
  }
  func.func @transform_2(%arg0: i32) -> (i32, i32) {
    %c0_i32 = arith.constant 0 : i32
    %c0_i32_0 = arith.constant 0 : i32
    %c0_i32_1 = arith.constant 0 : i32
    return %c0_i32, %c0_i32_0 : i32, i32
  }
  func.func @transform_3(%arg0: i32) -> (i32, i32) {
    %c0_i32 = arith.constant 0 : i32
    %c0_i32_0 = arith.constant 0 : i32
    %c0_i32_1 = arith.constant 0 : i32
    return %c0_i32, %c0_i32_0 : i32, i32
  }
  func.func @transform_4(%arg0: i32) -> (i32, i32) {
    %c0_i32 = arith.constant 0 : i32
    %c0_i32_0 = arith.constant 0 : i32
    return %arg0, %c0_i32 : i32, i32
  }
}

</mosaic_0001>

<llo_original>
// kernel: tpu_custom_call.1
$region0: #{tpu_custom_call.1}
  #allocation0 [shape = 'u32[]', space=smem, size = 0x4, offset = 0x4, fixed_abs, tag = 'smem constant byte address 0x4 - core index']
  #allocation1 [shape = 'u32[72,128]{1,0:T(1,128)}', space=vmem, size = 0x9000, scoped, tag = 'internal scratch']
  %s0 = inlined_call_operand.hbm [shape: f32[8,32], index: 0, kind: input, shape index: {}]
  %s1 = inlined_call_operand.hbm [shape: f32[32,128], index: 1, kind: input, shape index: {}]
  %s2 = inlined_call_operand.hbm [shape: f32[128,256], index: 2, kind: input, shape index: {}]
  %s3 = inlined_call_operand.hbm [shape: f32[1,384], index: 3, kind: input, shape index: {}]
  %s4 = inlined_call_operand.hbm [shape: f32[8,128], index: 4, kind: output, shape index: {}]
  %s5 = sld [smem:[#allocation0]]
  $region42: #{tpu_custom_call.1} parent=0
    _
  %s7 = ssub.s32 1, %s5
  %s8 = scalar_select 0, %s7, %s5
  $region1: #{tpu_custom_call.1} parent=0
    #allocation2 [shape = 'u8[4096]{0}', space=vmem, size = 0x1000, scoped, tag = 'input window, operand 0, single buffered']
    #allocation3 [shape = 's32[1]{0}', space=sflag, size = 0x4, scoped, tag = 'scoped memory for tpu_custom_call.1']
    #allocation4 [shape = 's32[1]{0}', space=sflag, size = 0x4, scoped, tag = 'scoped memory for tpu_custom_call.1']
    #allocation5 [shape = 'u8[16384]{0}', space=vmem, size = 0x4000, scoped, tag = 'input window, operand 1, single buffered']
    #allocation6 [shape = 's32[1]{0}', space=sflag, size = 0x4, scoped, tag = 'scoped memory for tpu_custom_call.1']
    #allocation7 [shape = 'u8[131072]{0}', space=vmem, size = 0x20000, scoped, tag = 'input window, operand 2, single buffered']
    #allocation8 [shape = 'u8[1536]{0}', space=vmem, size = 0x800, scoped, tag = 'input window, operand 3, single buffered']
    #allocation9 [shape = 's32[1]{0}', space=sflag, size = 0x4, scoped, tag = 'scoped memory for tpu_custom_call.1']
    #allocation10 [shape = 'u8[4096]{0}', space=vmem, size = 0x1000, scoped, tag = 'output window, operand 0, single buffered']
    %9 = vsyncpa [#allocation3], 0
    %10 = vsyncpa [#allocation6], 0
    %11 = vsyncpa [#allocation9], 0
    %12 = vsyncpa [#allocation4], 0
    // Predicated region
    $region2: #{tpu_custom_call.1} parent=1 // pred_check
      _
    $region3: #{tpu_custom_call.1} parent=1 // pred_check_branch
      %14 = sbr.rel (0) target = $region5
    $region4: #{tpu_custom_call.1} parent=1 // pred_region
      %16 = vsyncadd [#allocation3], 0
      %s18 = sshll.u32 %s0, 4
      %s19 = int_to_ptr.hbm [resolvable:$true] %s18
      %s20 = sshll.u32 [#allocation2], 4
      %s21 = int_to_ptr.vmem [resolvable:$true] %s20
      %23 = dma.hbm_to_vmem [thread:$0]  %s19, 128, %s21, [#allocation3]
    $region5: #{tpu_custom_call.1} parent=1 // pred_fallthru
      _
    // Predicated region
    $region6: #{tpu_custom_call.1} parent=1 // pred_check
      _
    $region7: #{tpu_custom_call.1} parent=1 // pred_check_branch
      %25 = sbr.rel (0) target = $region9
    $region8: #{tpu_custom_call.1} parent=1 // pred_region
      %27 = vsyncadd [#allocation6], 0
      %s28 = sshll.u32 %s1, 4
      %s29 = int_to_ptr.hbm [resolvable:$true] %s28
      %s30 = sshll.u32 [#allocation5], 4
      %s31 = int_to_ptr.vmem [resolvable:$true] %s30
      %36 = dma.hbm_to_vmem [thread:$0]  %s29, 512, %s31, [#allocation6], 128, 128, 8
    $region9: #{tpu_custom_call.1} parent=1 // pred_fallthru
      _
    // Predicated region
    $region10: #{tpu_custom_call.1} parent=1 // pred_check
      _
    $region11: #{tpu_custom_call.1} parent=1 // pred_check_branch
      %38 = sbr.rel (0) target = $region13
    $region12: #{tpu_custom_call.1} parent=1 // pred_region
      %40 = vsyncadd [#allocation6], 0
      %s41 = sshll.u32 %s2, 4
      %s42 = int_to_ptr.hbm [resolvable:$true] %s41
      %s43 = sshll.u32 [#allocation7], 4
      %s44 = int_to_ptr.vmem [resolvable:$true] %s43
      %49 = dma.hbm_to_vmem [thread:$0]  %s42, 4096, %s44, [#allocation6], 256, 256, 16
    $region13: #{tpu_custom_call.1} parent=1 // pred_fallthru
      _
    // Predicated region
    $region14: #{tpu_custom_call.1} parent=1 // pred_check
      _
    $region15: #{tpu_custom_call.1} parent=1 // pred_check_branch
      %51 = sbr.rel (0) target = $region17
    $region16: #{tpu_custom_call.1} parent=1 // pred_region
      %53 = vsyncadd [#allocation9], 0
      %s55 = sshll.u32 %s3, 4
      %s56 = int_to_ptr.hbm [resolvable:$true] %s55
      %s57 = sshll.u32 [#allocation8], 4
      %s58 = int_to_ptr.vmem [resolvable:$true] %s57
      %60 = dma.hbm_to_vmem [thread:$0]  %s56, 48, %s58, [#allocation9]
    $region17: #{tpu_custom_call.1} parent=1 // pred_fallthru
      _
    // Predicated region
    $region18: #{tpu_custom_call.1} parent=1 // pred_check
      _
    $region19: #{tpu_custom_call.1} parent=1 // pred_check_branch
      %62 = sbr.rel (0) target = $region21
    $region20: #{tpu_custom_call.1} parent=1 // pred_region
      %64 = dma.done [#allocation3], 128
    $region21: #{tpu_custom_call.1} parent=1 // pred_fallthru
      _
    // Predicated region
    $region22: #{tpu_custom_call.1} parent=1 // pred_check
      _
    $region23: #{tpu_custom_call.1} parent=1 // pred_check_branch
      %66 = sbr.rel (0) target = $region25
    $region24: #{tpu_custom_call.1} parent=1 // pred_region
      %68 = dma.done [#allocation6], 512
    $region25: #{tpu_custom_call.1} parent=1 // pred_fallthru
      _
    // Predicated region
    $region26: #{tpu_custom_call.1} parent=1 // pred_check
      _
    $region27: #{tpu_custom_call.1} parent=1 // pred_check_branch
      %70 = sbr.rel (0) target = $region29
    $region28: #{tpu_custom_call.1} parent=1 // pred_region
      %72 = dma.done [#allocation6], 4096
    $region29: #{tpu_custom_call.1} parent=1 // pred_fallthru
      _
    // Predicated region
    $region30: #{tpu_custom_call.1} parent=1 // pred_check
      _
    $region31: #{tpu_custom_call.1} parent=1 // pred_check_branch
      %74 = sbr.rel (0) target = $region33
    $region32: #{tpu_custom_call.1} parent=1 // pred_region
      %76 = dma.done [#allocation9], 48
    $region33: #{tpu_custom_call.1} parent=1 // pred_fallthru
      _
    %v77 = vld [vmem:[#allocation2] sm:$0xff]
    %v78 = vld [vmem:[#allocation8] sm:$0x1]
    %v79 = vld [vmem:[#allocation8 + $0x1] sm:$0x1]
    %v80 = vld [vmem:[#allocation8 + $0x2] sm:$0x1]
    %v81 = vld [vmem:[#allocation5] sm:$0xff]
    %v82 = vld [vmem:[#allocation5 + $0x8] sm:$0xff]
    %v83 = vld [vmem:[#allocation5 + $0x10] sm:$0xff]
    %v84 = vld [vmem:[#allocation5 + $0x18] sm:$0xff]
    %v86 = vperm.slane %v78, 0
    %vm88 = vcmask 261120
    %v90 = vsel %vm88, %v77, 0
    %92 = vmatpush.msra.mxu0 0.0
    %93 = vmatpush.msra.mxu0 0.0
    %94 = vmatpush.msra.mxu0 0.0
    %95 = vmatpush.msra.mxu0 0.0
    %96 = vmatpush.msra.mxu0 0.0
    %97 = vmatpush.msra.mxu0 0.0
    %98 = vmatpush.msra.mxu0 0.0
    %99 = vmatpush.msra.mxu0 0.0
    %100 = vmatpush.msra.mxu0 0.0
    %101 = vmatpush.msra.mxu0 0.0
    %102 = vmatpush.msra.mxu0 0.0
    %103 = vmatpush.msra.mxu0 0.0
    %104 = vmatpush.msra.mxu0 %v84
    %105 = vmatpush.msra.mxu0 %v83
    %106 = vmatpush.msra.mxu0 %v82
    %107 = vmatpush.msra.mxu0 %v81
    %108 = vmatmul.f32.gmra.mxu0 %v90
    %v109 = vpop.f32.mrf.mxu0
    %v110 = vadd.f32 %v86, %v109
    %111 = vdwg.mxu0
    %v112 = vmax.f32 %v110, 0.0
    %v113 = vld [vmem:[#allocation7] sm:$0xff]
    %v114 = vld [vmem:[#allocation7 + $0x10] sm:$0xff]
    %v115 = vld [vmem:[#allocation7 + $0x20] sm:$0xff]
    %v116 = vld [vmem:[#allocation7 + $0x30] sm:$0xff]
    %v117 = vld [vmem:[#allocation7 + $0x40] sm:$0xff]
    %v118 = vld [vmem:[#allocation7 + $0x50] sm:$0xff]
    %v119 = vld [vmem:[#allocation7 + $0x60] sm:$0xff]
    %v120 = vld [vmem:[#allocation7 + $0x70] sm:$0xff]
    %v121 = vld [vmem:[#allocation7 + $0x80] sm:$0xff]
    %v122 = vld [vmem:[#allocation7 + $0x90] sm:$0xff]
    %v123 = vld [vmem:[#allocation7 + $0xa0] sm:$0xff]
    %v124 = vld [vmem:[#allocation7 + $0xb0] sm:$0xff]
    %v125 = vld [vmem:[#allocation7 + $0xc0] sm:$0xff]
    %v126 = vld [vmem:[#allocation7 + $0xd0] sm:$0xff]
    %v127 = vld [vmem:[#allocation7 + $0xe0] sm:$0xff]
    %v128 = vld [vmem:[#allocation7 + $0xf0] sm:$0xff]
    %v130 = vperm.slane %v79, 0
    %132 = vmatpush.msra.mxu0 %v128
    %133 = vmatpush.msra.mxu0 %v127
    %134 = vmatpush.msra.mxu0 %v126
    %135 = vmatpush.msra.mxu0 %v125
    %136 = vmatpush.msra.mxu0 %v124
    %137 = vmatpush.msra.mxu0 %v123
    %138 = vmatpush.msra.mxu0 %v122
    %139 = vmatpush.msra.mxu0 %v121
    %140 = vmatpush.msra.mxu0 %v120
    %141 = vmatpush.msra.mxu0 %v119
    %142 = vmatpush.msra.mxu0 %v118
    %143 = vmatpush.msra.mxu0 %v117
    %144 = vmatpush.msra.mxu0 %v116
    %145 = vmatpush.msra.mxu0 %v115
    %146 = vmatpush.msra.mxu0 %v114
    %147 = vmatpush.msra.mxu0 %v113
    %148 = vmatmul.f32.gmra.mxu0 %v112
    %v149 = vpop.f32.mrf.mxu0
    %v150 = vadd.f32 %v130, %v149
    %151 = vdwg.mxu0
    %v152 = vmax.f32 %v150, 0.0
    %v153 = vld [vmem:[#allocation7 + $0x8] sm:$0xff]
    %v154 = vld [vmem:[#allocation7 + $0x18] sm:$0xff]
    %v155 = vld [vmem:[#allocation7 + $0x28] sm:$0xff]
    %v156 = vld [vmem:[#allocation7 + $0x38] sm:$0xff]
    %v157 = vld [vmem:[#allocation7 + $0x48] sm:$0xff]
    %v158 = vld [vmem:[#allocation7 + $0x58] sm:$0xff]
    %v159 = vld [vmem:[#allocation7 + $0x68] sm:$0xff]
    %v160 = vld [vmem:[#allocation7 + $0x78] sm:$0xff]
    %v161 = vld [vmem:[#allocation7 + $0x88] sm:$0xff]
    %v162 = vld [vmem:[#allocation7 + $0x98] sm:$0xff]
    %v163 = vld [vmem:[#allocation7 + $0xa8] sm:$0xff]
    %v164 = vld [vmem:[#allocation7 + $0xb8] sm:$0xff]
    %v165 = vld [vmem:[#allocation7 + $0xc8] sm:$0xff]
    %v166 = vld [vmem:[#allocation7 + $0xd8] sm:$0xff]
    %v167 = vld [vmem:[#allocation7 + $0xe8] sm:$0xff]
    %v168 = vld [vmem:[#allocation7 + $0xf8] sm:$0xff]
    %v170 = vperm.slane %v80, 0
    %172 = vmatpush.msra.mxu0 %v168
    %173 = vmatpush.msra.mxu0 %v167
    %174 = vmatpush.msra.mxu0 %v166
    %175 = vmatpush.msra.mxu0 %v165
    %176 = vmatpush.msra.mxu0 %v164
    %177 = vmatpush.msra.mxu0 %v163
    %178 = vmatpush.msra.mxu0 %v162
    %179 = vmatpush.msra.mxu0 %v161
    %180 = vmatpush.msra.mxu0 %v160
    %181 = vmatpush.msra.mxu0 %v159
    %182 = vmatpush.msra.mxu0 %v158
    %183 = vmatpush.msra.mxu0 %v157
    %184 = vmatpush.msra.mxu0 %v156
    %185 = vmatpush.msra.mxu0 %v155
    %186 = vmatpush.msra.mxu0 %v154
    %187 = vmatpush.msra.mxu0 %v153
    %188 = vmatmul.f32.gmra.mxu0 %v152
    %v189 = vpop.f32.mrf.mxu0
    %v190 = vadd.f32 %v170, %v189
    %191 = vdwg.mxu0
    %192 = vst [vmem:[#allocation10] sm:$0xff] %v190
    // Predicated region
    $region34: #{tpu_custom_call.1} parent=1 // pred_check
      _
    $region35: #{tpu_custom_call.1} parent=1 // pred_check_branch
      %194 = sbr.rel (0) target = $region37
    $region36: #{tpu_custom_call.1} parent=1 // pred_region
      %196 = vsyncadd [#allocation4], 0
      %s198 = sshll.u32 [#allocation10], 4
      %s199 = int_to_ptr.vmem [resolvable:$true] %s198
      %s200 = sshll.u32 %s4, 4
      %s201 = int_to_ptr.hbm [resolvable:$true] %s200
      %203 = dma.vmem_to_hbm [thread:$0]  %s199, 128, %s201, [#allocation4]
    $region37: #{tpu_custom_call.1} parent=1 // pred_fallthru
      _
    // Predicated region
    $region38: #{tpu_custom_call.1} parent=1 // pred_check
      _
    $region39: #{tpu_custom_call.1} parent=1 // pred_check_branch
      %205 = sbr.rel (0) target = $region41
    $region40: #{tpu_custom_call.1} parent=1 // pred_region
      %207 = dma.done [#allocation4], 128
    $region41: #{tpu_custom_call.1} parent=1 // pred_fallthru
      _
    %208 = vsyncpa [#allocation3], 1
    %209 = vsyncpa [#allocation6], 1
    %210 = vsyncpa [#allocation9], 1
    %211 = vsyncpa [#allocation4], 1

</llo_original>
